<compile_context>
chip_gen: v7x
topology: tpu7x:2x2x1
jax: 0.10.0
libtpu: 0.0.40
codegen_flags: <defaults>
</compile_context>

<pallas_src>
import functools
import math

import jax
import jax.numpy as jnp
from jax.experimental import pallas as pl
from jax.experimental.pallas import tpu as pltpu

LANE = 128
_SINGLE_BLOCK_MAX_ROWS = 2048
_TILE_ROWS = 1024


# ----------------------------------------------------------------------------
# Segmentation kernel: accumulates [intersection, sum(y_hat), sum(y), bce_sum]
# partial rows directly into the (per-parallel-slice) output block.
# ----------------------------------------------------------------------------
def _seg_kernel(yh_ref, yt_ref, out_ref, *, tile_rows, inner_steps,
                valid_rows, ragged):
    i = pl.program_id(1)

    @pl.when(i == 0)
    def _():
        out_ref[...] = jnp.zeros_like(out_ref)

    # Upcast after load: HBM traffic stays at the input's native width.
    yh = yh_ref[...].astype(jnp.float32)
    yt = yt_ref[...].astype(jnp.float32)

    if ragged:
        # Last tile extends past the array: mask the undefined tail to zeros
        # (zero rows are loss-neutral for every accumulated quantity).
        blk = pl.program_id(0) * inner_steps + i
        valid = valid_rows - blk * tile_rows
        row_ids = jax.lax.broadcasted_iota(jnp.int32, (tile_rows, LANE), 0)
        keep = row_ids < valid
        yh = jnp.where(keep, yh, 0.0)
        yt = jnp.where(keep, yt, 0.0)

    # PyTorch-style binary_cross_entropy with log clamping at -100.
    # TODO(synk): for hard {0,1} targets this could be a single log (v7x EUP
    # saving); kept in the general two-log form to support soft masks.
    ln_p = jnp.maximum(jnp.log(yh), -100.0)
    ln_1mp = jnp.maximum(jnp.log(1.0 - yh), -100.0)
    bce = -(yt * ln_p + (1.0 - yt) * ln_1mp)

    out_ref[0, 0:1, :] += jnp.sum(yh * yt, axis=0, keepdims=True)
    out_ref[0, 1:2, :] += jnp.sum(yh, axis=0, keepdims=True)
    out_ref[0, 2:3, :] += jnp.sum(yt, axis=0, keepdims=True)
    out_ref[0, 3:4, :] += jnp.sum(bce, axis=0, keepdims=True)


def _seg_partial_sums(y_hat, y):
    n = y_hat.size
    yh = y_hat.reshape(-1)
    yt = y.reshape(-1)

    if n % LANE != 0:
        # Rare for segmentation maps; costs one extra materialisation.
        pad = LANE - n % LANE
        yh = jnp.pad(yh, (0, pad))
        yt = jnp.pad(yt, (0, pad))
    rows = yh.shape[0] // LANE
    yh = yh.reshape(rows, LANE)   # metadata-only when no pad happened above
    yt = yt.reshape(rows, LANE)

    if rows <= _SINGLE_BLOCK_MAX_ROWS:
        # Single whole-array block; tiny pad keeps bf16 (16,128) tiling happy.
        tile_rows = -(-rows // 16) * 16
        if tile_rows != rows:
            yh = jnp.pad(yh, ((0, tile_rows - rows), (0, 0)))
            yt = jnp.pad(yt, ((0, tile_rows - rows), (0, 0)))
        n_outer, inner_steps, ragged = 1, 1, False
        valid_rows = tile_rows
    else:
        tile_rows = _TILE_ROWS
        n_blocks = -(-rows // tile_rows)
        if n_blocks % 2 == 0:
            # Shard the streaming reduction across both TensorCores on v7x.
            n_outer, inner_steps = 2, n_blocks // 2
        else:
            n_outer, inner_steps = 1, n_blocks
        ragged = (rows % tile_rows) != 0
        valid_rows = rows

    bspec_kwargs = {}
    if inner_steps >= 3:
        bspec_kwargs["pipeline_mode"] = pl.Buffered(3)
    in_spec = pl.BlockSpec((tile_rows, LANE),
                           lambda p, i: (p * inner_steps + i, 0),
                           **bspec_kwargs)

    kernel = functools.partial(_seg_kernel, tile_rows=tile_rows,
                               inner_steps=inner_steps,
                               valid_rows=valid_rows, ragged=ragged)

    partial = pl.pallas_call(
        kernel,
        out_shape=jax.ShapeDtypeStruct((n_outer, 4, LANE), jnp.float32),
        grid=(n_outer, inner_steps),
        in_specs=[in_spec, in_spec],
        out_specs=pl.BlockSpec((1, 4, LANE), lambda p, i: (p, 0, 0)),
        compiler_params=pltpu.CompilerParams(
            dimension_semantics=("parallel", "arbitrary")),
    )(yh, yt)

    # Tiny finalize in plain JAX: [intersection, sum_yhat, sum_y, bce_sum].
    return jnp.sum(partial, axis=(0, 2))


# ----------------------------------------------------------------------------
# Classification kernel: single-block kernel producing
#   [ob_bce_sum, weighted_fine_nll_sum, weight_sum, top_level_nll_sum]
# Raw (B, C+1) logits/targets are consumed directly; all padding/selection is
# done with constant masks built once in make_mcnn_loss.
# ----------------------------------------------------------------------------
def _cls_kernel(zhat_ref, z_ref, w_ref, fmask_ref, gmask_ref, out_ref, *,
                num_top):
    za = zhat_ref[...].astype(jnp.float32)   # (B, C+1) logits
    ta = z_ref[...].astype(jnp.float32)      # (B, C+1) targets
    w = w_ref[...]                           # (1, C+1) class weights (0 @ obj)
    fm = fmask_ref[...]                      # (1, C+1) 1.0 on fine columns
    gm = gmask_ref[...]                      # (G, C+1) fine->top group masks

    # Objectness BCEWithLogits, counted only on the object column.
    om = 1.0 - fm
    ob_el = jnp.maximum(za, 0.0) - za * ta + jnp.log(1.0 + jnp.exp(-jnp.abs(za)))
    ob_sum = jnp.sum(ob_el * om)

    # Masked log-softmax over the fine classes (object column -> -1e30).
    zf = jnp.where(fm > 0.5, za, -1e30)
    tf = ta * fm
    row_max = jnp.max(zf, axis=-1, keepdims=True)
    e = jnp.exp(zf - row_max)
    den = jnp.sum(e, axis=-1, keepdims=True)
    logp = (zf - row_max) - jnp.log(den)
    probs = e / den

    w_i = jnp.sum(tf * w, axis=-1, keepdims=True)            # (B, 1)
    fine_nll = -jnp.sum(tf * logp, axis=-1, keepdims=True)   # (B, 1)

    # Top-level CE via unrolled masked reductions (num_top is small & static).
    top_sum = jnp.float32(0.0)
    for g_idx in range(num_top):
        g_row = gm[g_idx:g_idx + 1, :]                        # (1, C+1)
        p_g = jnp.sum(probs * g_row, axis=-1, keepdims=True)  # (B, 1)
        t_g = jnp.sum(tf * g_row, axis=-1, keepdims=True)
        top_sum += jnp.sum(-t_g * jnp.log(jnp.maximum(p_g, 1e-30)))

    out_ref[0] = ob_sum
    out_ref[1] = jnp.sum(w_i * fine_nll)
    out_ref[2] = jnp.sum(w_i)
    out_ref[3] = top_sum


def _cls_sums(z_hat, z, w_row, fine_mask, group_mask, num_top):
    kernel = functools.partial(_cls_kernel, num_top=num_top)
    return pl.pallas_call(
        kernel,
        out_shape=jax.ShapeDtypeStruct((4,), jnp.float32),
        in_specs=[pl.BlockSpec(memory_space=pltpu.MemorySpace.VMEM)] * 5,
        out_specs=pl.BlockSpec(memory_space=pltpu.MemorySpace.SMEM),
    )(z_hat, z, w_row, fine_mask, group_mask)


# ----------------------------------------------------------------------------
# Factory mirroring MCNNLoss.__init__ / forward.  Constants are hoisted here.
# ----------------------------------------------------------------------------
def make_mcnn_loss(top_lv_map, class_weights, seg_k, ob_k, stage=0):
    c = len(class_weights)
    assert len(top_lv_map) == c
    g = int(max(top_lv_map)) + 1
    c1 = c + 1

    # Invariant per model: build once, baked into the jitted graph.
    w_row = jnp.zeros((1, c1), jnp.float32).at[0, :c].set(
        jnp.asarray(class_weights, jnp.float32))
    fine_mask = jnp.zeros((1, c1), jnp.float32).at[0, :c].set(1.0)
    oh = jax.nn.one_hot(jnp.asarray(top_lv_map, jnp.int32), g, dtype=jnp.float32)
    group_mask = jnp.zeros((g, c1), jnp.float32).at[:, :c].set(oh.T)
    seg_k = float(seg_k)
    ob_k = float(ob_k)

    def loss_fn(y_hat, y, z_hat, z):
        loss = jnp.float32(0.0)
        if stage in (0, 1):
            s = _seg_partial_sums(y_hat, y)
            inter, s_yh, s_y, bce_sum = s[0], s[1], s[2], s[3]
            dice_loss = 1.0 - (2.0 * inter + 1.0) / (s_yh + s_y + 1.0)
            binary_ce = bce_sum / float(y_hat.size)
            loss = loss + seg_k * (binary_ce + dice_loss)
        if stage in (0, 2):
            b = z_hat.shape[0]
            csum = _cls_sums(z_hat, z, w_row, fine_mask, group_mask, g)
            ob_loss = csum[0] / b
            cl_loss = csum[1] / csum[2] + csum[3] / b
            loss = loss + ob_k * ob_loss + cl_loss
        return loss

    return jax.jit(loss_fn)


# ----------------------------------------------------------------------------
# Pure-JAX reference (same math, no Pallas) for validation.
# ----------------------------------------------------------------------------
def reference_loss(y_hat, y, z_hat, z, *, top_lv_map, class_weights,
                   seg_k, ob_k):
    yh = y_hat.astype(jnp.float32)
    yt = y.astype(jnp.float32)
    inter = jnp.sum(yh * yt)
    dice = 1.0 - (2.0 * inter + 1.0) / (jnp.sum(yh) + jnp.sum(yt) + 1.0)
    bce = jnp.mean(-(yt * jnp.maximum(jnp.log(yh), -100.0)
                     + (1.0 - yt) * jnp.maximum(jnp.log(1.0 - yh), -100.0)))
    seg = bce + dice

    zh = z_hat.astype(jnp.float32)
    zt = z.astype(jnp.float32)
    x, t = zh[:, -1], zt[:, -1]
    ob = jnp.mean(jnp.maximum(x, 0.0) - x * t
                  + jnp.log(1.0 + jnp.exp(-jnp.abs(x))))

    zf, tf = zh[:, :-1], zt[:, :-1]
    logp = jax.nn.log_softmax(zf, axis=-1)
    probs = jnp.exp(logp)
    w = jnp.asarray(class_weights, jnp.float32)
    g = int(max(top_lv_map)) + 1
    m = jax.nn.one_hot(jnp.asarray(top_lv_map, jnp.int32), g, dtype=jnp.float32)
    w_i = tf @ w
    fine = -(tf * logp).sum(-1)
    top_p = probs @ m
    top_t = tf @ m
    top = -(top_t * jnp.log(jnp.maximum(top_p, 1e-30))).sum(-1)
    cl = (w_i * fine).sum() / w_i.sum() + top.mean()

    return seg_k * seg + ob_k * ob + cl


if __name__ == "__main__":
    key = jax.random.PRNGKey(0)
    keys = jax.random.split(key, 8)

    NUM_FINE, NUM_TOP = 7, 3
    top_lv_map = [0, 0, 1, 1, 1, 2, 2]
    class_weights = [1.0, 2.0, 0.5, 1.5, 1.0, 0.8, 1.2]
    seg_k, ob_k = 1.0, 0.5

    loss_fn = make_mcnn_loss(top_lv_map, class_weights, seg_k, ob_k, stage=0)
    ref_fn = functools.partial(reference_loss, top_lv_map=top_lv_map,
                               class_weights=class_weights,
                               seg_k=seg_k, ob_k=ob_k)

    def check(name, got, want, rtol=2e-3):
        got_f = float(got)
        want_f = float(want)
        assert math.isfinite(got_f), f"{name}: non-finite loss {got_f}"
        assert abs(got_f - want_f) <= rtol * max(1.0, abs(want_f)), (
            f"{name}: kernel {got_f} vs ref {want_f}")

    # --- case 1: small f32 tensors (single-block seg path) -------------------
    B, C, H, W = 2, 1, 16, 16
    y_hat = jax.nn.sigmoid(jax.random.normal(keys[0], (B, C, H, W), jnp.float32))
    y = jax.random.bernoulli(keys[1], 0.3, (B, C, H, W)).astype(jnp.float32)
    z_hat = jax.random.normal(keys[2], (B, NUM_FINE + 1), jnp.float32)
    cls_idx = jax.random.randint(keys[3], (B,), 0, NUM_FINE)
    z = jnp.concatenate(
        [jax.nn.one_hot(cls_idx, NUM_FINE, dtype=jnp.float32),
         jax.random.bernoulli(keys[4], 0.5, (B,)).astype(jnp.float32)[:, None]],
        axis=1)

    loss1 = jax.block_until_ready(loss_fn(y_hat, y, z_hat, z))
    check("small", loss1, ref_fn(y_hat, y, z_hat, z))

    # --- case 2: larger bf16 tensors (tiled + dual-TC + 3-buffer path) -------
    H2, W2 = 1024, 512          # 2*1*1024*512 / 128 = 8192 rows -> 8 tiles
    y_hat2 = jax.nn.sigmoid(
        jax.random.normal(keys[5], (B, C, H2, W2), jnp.float32)
    ).astype(jnp.bfloat16)
    y2 = jax.random.bernoulli(keys[6], 0.3, (B, C, H2, W2)).astype(jnp.bfloat16)

    loss2 = jax.block_until_ready(loss_fn(y_hat2, y2, z_hat, z))
    check("large", loss2, ref_fn(y_hat2, y2, z_hat, z))

    print("KERNEL_OK")
</pallas_src>

<mosaic_0001>
module attributes {stable_mosaic.version = 11 : i64} {
  func.func @_seg_kernel(%arg0: i32, %arg1: i32, %arg2: memref<16x128xf32, #tpu.memory_space<vmem>>, %arg3: memref<16x128xf32, #tpu.memory_space<vmem>>, %arg4: memref<1x4x128xf32, #tpu.memory_space<vmem>>) attributes {dimension_semantics = [#tpu.dimension_semantics<parallel>, #tpu.dimension_semantics<arbitrary>], iteration_bounds = array<i64: 1, 1>, scalar_prefetch = 0 : i64, scratch_operands = 0 : i64, tpu.core_type = #tpu.core_type<tc>, window_params = [{transform_indices = @transform_0, window_bounds = array<i64: 16, 128>}, {transform_indices = @transform_1, window_bounds = array<i64: 16, 128>}, {transform_indices = @transform_2, window_bounds = array<i64: 1, 4, 128>}]} {
    %c0_i32 = arith.constant 0 : i32
    %0 = arith.cmpi eq, %arg1, %c0_i32 : i32
    %1 = arith.extui %0 : i1 to i32
    %c0_i32_0 = arith.constant 0 : i32
    %2 = arith.cmpi ne, %1, %c0_i32_0 : i32
    scf.if %2 {
      %cst_33 = arith.constant 0.000000e+00 : f32
      %53 = vector.broadcast %cst_33 : f32 to vector<1x4x128xf32>
      %c0_34 = arith.constant 0 : index
      %c0_35 = arith.constant 0 : index
      %c0_36 = arith.constant 0 : index
      %54 = vector.load %arg4[%c0_34, %c0_35, %c0_36] : memref<1x4x128xf32, #tpu.memory_space<vmem>>, vector<1x4x128xf32>
      tpu.vector_store %arg4[%c0_34, %c0_35, %c0_36], %53 {strides = array<i32>} : memref<1x4x128xf32, #tpu.memory_space<vmem>>, vector<1x4x128xf32>,
    } else {
    }
    %c0 = arith.constant 0 : index
    %c0_1 = arith.constant 0 : index
    %3 = vector.load %arg2[%c0, %c0_1] : memref<16x128xf32, #tpu.memory_space<vmem>>, vector<16x128xf32>
    %c0_2 = arith.constant 0 : index
    %c0_3 = arith.constant 0 : index
    %4 = vector.load %arg3[%c0_2, %c0_3] : memref<16x128xf32, #tpu.memory_space<vmem>>, vector<16x128xf32>
    %5 = math.log %3 : vector<16x128xf32>
    %cst = arith.constant -1.000000e+02 : f32
    %6 = vector.broadcast %cst : f32 to vector<16x128xf32>
    %7 = arith.maximumf %5, %6 : vector<16x128xf32>
    %cst_4 = arith.constant 1.000000e+00 : f32
    %8 = vector.broadcast %cst_4 : f32 to vector<16x128xf32>
    %9 = arith.subf %8, %3 : vector<16x128xf32>
    %10 = math.log %9 : vector<16x128xf32>
    %cst_5 = arith.constant -1.000000e+02 : f32
    %11 = vector.broadcast %cst_5 : f32 to vector<16x128xf32>
    %12 = arith.maximumf %10, %11 : vector<16x128xf32>
    %13 = arith.mulf %4, %7 : vector<16x128xf32>
    %cst_6 = arith.constant 1.000000e+00 : f32
    %14 = vector.broadcast %cst_6 : f32 to vector<16x128xf32>
    %15 = arith.subf %14, %4 : vector<16x128xf32>
    %16 = arith.mulf %15, %12 : vector<16x128xf32>
    %17 = arith.addf %13, %16 : vector<16x128xf32>
    %cst_7 = arith.constant 0.000000e+00 : f32
    %18 = vector.broadcast %cst_7 : f32 to vector<16x128xf32>
    %19 = arith.subf %18, %17 : vector<16x128xf32>
    %c0_8 = arith.constant 0 : index
    %c0_9 = arith.constant 0 : index
    %c0_10 = arith.constant 0 : index
    %20 = vector.load %arg4[%c0_8, %c0_9, %c0_10] : memref<1x4x128xf32, #tpu.memory_space<vmem>>, vector<1x1x128xf32>
    %21 = vector.shape_cast %20 : vector<1x1x128xf32> to vector<1x128xf32>
    %22 = arith.mulf %3, %4 : vector<16x128xf32>
    %cst_11 = arith.constant dense<0.000000e+00> : vector<128xf32>
    %23 = vector.multi_reduction <add>, %22, %cst_11 [0] : vector<16x128xf32> to vector<128xf32>
    %24 = vector.shape_cast %23 : vector<128xf32> to vector<1x128xf32>
    %25 = arith.addf %21, %24 : vector<1x128xf32>
    %c0_12 = arith.constant 0 : index
    %c0_13 = arith.constant 0 : index
    %c0_14 = arith.constant 0 : index
    %26 = vector.load %arg4[%c0_12, %c0_13, %c0_14] : memref<1x4x128xf32, #tpu.memory_space<vmem>>, vector<1x1x128xf32>
    %27 = vector.shape_cast %26 : vector<1x1x128xf32> to vector<1x128xf32>
    %28 = vector.shape_cast %25 : vector<1x128xf32> to vector<1x1x128xf32>
    tpu.vector_store %arg4[%c0_12, %c0_13, %c0_14], %28 {strides = array<i32>} : memref<1x4x128xf32, #tpu.memory_space<vmem>>, vector<1x1x128xf32>,
    %c0_15 = arith.constant 0 : index
    %c1 = arith.constant 1 : index
    %c0_16 = arith.constant 0 : index
    %29 = vector.load %arg4[%c0_15, %c1, %c0_16] : memref<1x4x128xf32, #tpu.memory_space<vmem>>, vector<1x1x128xf32>
    %30 = vector.shape_cast %29 : vector<1x1x128xf32> to vector<1x128xf32>
    %cst_17 = arith.constant dense<0.000000e+00> : vector<128xf32>
    %31 = vector.multi_reduction <add>, %3, %cst_17 [0] : vector<16x128xf32> to vector<128xf32>
    %32 = vector.shape_cast %31 : vector<128xf32> to vector<1x128xf32>
    %33 = arith.addf %30, %32 : vector<1x128xf32>
    %c0_18 = arith.constant 0 : index
    %c1_19 = arith.constant 1 : index
    %c0_20 = arith.constant 0 : index
    %34 = vector.load %arg4[%c0_18, %c1_19, %c0_20] : memref<1x4x128xf32, #tpu.memory_space<vmem>>, vector<1x1x128xf32>
    %35 = vector.shape_cast %34 : vector<1x1x128xf32> to vector<1x128xf32>
    %36 = vector.shape_cast %33 : vector<1x128xf32> to vector<1x1x128xf32>
    tpu.vector_store %arg4[%c0_18, %c1_19, %c0_20], %36 {strides = array<i32>} : memref<1x4x128xf32, #tpu.memory_space<vmem>>, vector<1x1x128xf32>,
    %c0_21 = arith.constant 0 : index
    %c2 = arith.constant 2 : index
    %c0_22 = arith.constant 0 : index
    %37 = vector.load %arg4[%c0_21, %c2, %c0_22] : memref<1x4x128xf32, #tpu.memory_space<vmem>>, vector<1x1x128xf32>
    %38 = vector.shape_cast %37 : vector<1x1x128xf32> to vector<1x128xf32>
    %cst_23 = arith.constant dense<0.000000e+00> : vector<128xf32>
    %39 = vector.multi_reduction <add>, %4, %cst_23 [0] : vector<16x128xf32> to vector<128xf32>
    %40 = vector.shape_cast %39 : vector<128xf32> to vector<1x128xf32>
    %41 = arith.addf %38, %40 : vector<1x128xf32>
    %c0_24 = arith.constant 0 : index
    %c2_25 = arith.constant 2 : index
    %c0_26 = arith.constant 0 : index
    %42 = vector.load %arg4[%c0_24, %c2_25, %c0_26] : memref<1x4x128xf32, #tpu.memory_space<vmem>>, vector<1x1x128xf32>
    %43 = vector.shape_cast %42 : vector<1x1x128xf32> to vector<1x128xf32>
    %44 = vector.shape_cast %41 : vector<1x128xf32> to vector<1x1x128xf32>
    tpu.vector_store %arg4[%c0_24, %c2_25, %c0_26], %44 {strides = array<i32>} : memref<1x4x128xf32, #tpu.memory_space<vmem>>, vector<1x1x128xf32>,
    %c0_27 = arith.constant 0 : index
    %c3 = arith.constant 3 : index
    %c0_28 = arith.constant 0 : index
    %45 = vector.load %arg4[%c0_27, %c3, %c0_28] : memref<1x4x128xf32, #tpu.memory_space<vmem>>, vector<1x1x128xf32>
    %46 = vector.shape_cast %45 : vector<1x1x128xf32> to vector<1x128xf32>
    %cst_29 = arith.constant dense<0.000000e+00> : vector<128xf32>
    %47 = vector.multi_reduction <add>, %19, %cst_29 [0] : vector<16x128xf32> to vector<128xf32>
    %48 = vector.shape_cast %47 : vector<128xf32> to vector<1x128xf32>
    %49 = arith.addf %46, %48 : vector<1x128xf32>
    %c0_30 = arith.constant 0 : index
    %c3_31 = arith.constant 3 : index
    %c0_32 = arith.constant 0 : index
    %50 = vector.load %arg4[%c0_30, %c3_31, %c0_32] : memref<1x4x128xf32, #tpu.memory_space<vmem>>, vector<1x1x128xf32>
    %51 = vector.shape_cast %50 : vector<1x1x128xf32> to vector<1x128xf32>
    %52 = vector.shape_cast %49 : vector<1x128xf32> to vector<1x1x128xf32>
    tpu.vector_store %arg4[%c0_30, %c3_31, %c0_32], %52 {strides = array<i32>} : memref<1x4x128xf32, #tpu.memory_space<vmem>>, vector<1x1x128xf32>,
    return
  }
  func.func @transform_0(%arg0: i32, %arg1: i32) -> (i32, i32) {
    %c1_i32 = arith.constant 1 : i32
    %0 = arith.muli %arg0, %c1_i32 : i32
    %1 = arith.addi %0, %arg1 : i32
    %c0_i32 = arith.constant 0 : i32
    %c0_i32_0 = arith.constant 0 : i32
    return %1, %c0_i32 : i32, i32
  }
  func.func @transform_1(%arg0: i32, %arg1: i32) -> (i32, i32) {
    %c1_i32 = arith.constant 1 : i32
    %0 = arith.muli %arg0, %c1_i32 : i32
    %1 = arith.addi %0, %arg1 : i32
    %c0_i32 = arith.constant 0 : i32
    %c0_i32_0 = arith.constant 0 : i32
    return %1, %c0_i32 : i32, i32
  }
  func.func @transform_2(%arg0: i32, %arg1: i32) -> (i32, i32, i32) {
    %c0_i32 = arith.constant 0 : i32
    %c0_i32_0 = arith.constant 0 : i32
    %c0_i32_1 = arith.constant 0 : i32
    return %arg0, %c0_i32, %c0_i32_0 : i32, i32, i32
  }
}

module attributes {stable_mosaic.version = 11 : i64} {
  func.func @_cls_kernel(%arg0: memref<2x8xf32, #tpu.memory_space<vmem>>, %arg1: memref<2x8xf32, #tpu.memory_space<vmem>>, %arg2: memref<1x8xf32, #tpu.memory_space<vmem>>, %arg3: memref<1x8xf32, #tpu.memory_space<vmem>>, %arg4: memref<3x8xf32, #tpu.memory_space<vmem>>, %arg5: memref<4xf32, #tpu.memory_space<smem>>) attributes {dimension_semantics = [], scalar_prefetch = 0 : i64, scratch_operands = 0 : i64, tpu.core_type = #tpu.core_type<tc>} {
    %c0 = arith.constant 0 : index
    %c0_0 = arith.constant 0 : index
    %0 = vector.load %arg0[%c0, %c0_0] : memref<2x8xf32, #tpu.memory_space<vmem>>, vector<2x8xf32>
    %c0_1 = arith.constant 0 : index
    %c0_2 = arith.constant 0 : index
    %1 = vector.load %arg1[%c0_1, %c0_2] : memref<2x8xf32, #tpu.memory_space<vmem>>, vector<2x8xf32>
    %c0_3 = arith.constant 0 : index
    %c0_4 = arith.constant 0 : index
    %2 = vector.load %arg2[%c0_3, %c0_4] : memref<1x8xf32, #tpu.memory_space<vmem>>, vector<1x8xf32>
    %c0_5 = arith.constant 0 : index
    %c0_6 = arith.constant 0 : index
    %3 = vector.load %arg3[%c0_5, %c0_6] : memref<1x8xf32, #tpu.memory_space<vmem>>, vector<1x8xf32>
    %c0_7 = arith.constant 0 : index
    %c0_8 = arith.constant 0 : index
    %4 = vector.load %arg4[%c0_7, %c0_8] : memref<3x8xf32, #tpu.memory_space<vmem>>, vector<3x8xf32>
    %cst = arith.constant 1.000000e+00 : f32
    %5 = vector.broadcast %cst : f32 to vector<1x8xf32>
    %6 = arith.subf %5, %3 : vector<1x8xf32>
    %cst_9 = arith.constant 0.000000e+00 : f32
    %7 = vector.broadcast %cst_9 : f32 to vector<2x8xf32>
    %8 = arith.maximumf %0, %7 : vector<2x8xf32>
    %9 = arith.mulf %0, %1 : vector<2x8xf32>
    %10 = arith.subf %8, %9 : vector<2x8xf32>
    %11 = math.absf %0 : vector<2x8xf32>
    %cst_10 = arith.constant 0.000000e+00 : f32
    %12 = vector.broadcast %cst_10 : f32 to vector<2x8xf32>
    %13 = arith.subf %12, %11 : vector<2x8xf32>
    %14 = math.exp %13 : vector<2x8xf32>
    %cst_11 = arith.constant 1.000000e+00 : f32
    %15 = vector.broadcast %cst_11 : f32 to vector<2x8xf32>
    %16 = arith.addf %15, %14 : vector<2x8xf32>
    %17 = math.log %16 : vector<2x8xf32>
    %18 = arith.addf %10, %17 : vector<2x8xf32>
    %19 = vector.broadcast %6 : vector<1x8xf32> to vector<2x8xf32>
    %20 = arith.mulf %18, %19 : vector<2x8xf32>
    %21 = vector.shape_cast %20 : vector<2x8xf32> to vector<1x2x8xf32>
    %cst_12 = arith.constant dense<0.000000e+00> : vector<1xf32>
    %22 = vector.multi_reduction <add>, %21, %cst_12 [1, 2] : vector<1x2x8xf32> to vector<1xf32>
    %23 = vector.shape_cast %22 : vector<1xf32> to vector<1x1x1xf32>
    %24 = vector.extract %23[0, 0, 0] : f32 from vector<1x1x1xf32>
    %cst_13 = arith.constant 5.000000e-01 : f32
    %25 = vector.broadcast %cst_13 : f32 to vector<1x8xf32>
    %26 = arith.cmpf ogt, %3, %25 : vector<1x8xf32>
    %cst_14 = arith.constant -1.000000e+30 : f32
    %27 = vector.shape_cast %26 : vector<1x8xi1> to vector<1x8xi1>
    %28 = vector.broadcast %27 : vector<1x8xi1> to vector<2x8xi1>
    %29 = vector.broadcast %cst_14 : f32 to vector<2x8xf32>
    %30 = arith.select %28, %0, %29 : vector<2x8xi1>, vector<2x8xf32>
    %31 = vector.broadcast %3 : vector<1x8xf32> to vector<2x8xf32>
    %32 = arith.mulf %1, %31 : vector<2x8xf32>
    %cst_15 = arith.constant dense<0xFF800000> : vector<2xf32>
    %33 = vector.multi_reduction <maximumf>, %30, %cst_15 [1] : vector<2x8xf32> to vector<2xf32>
    %34 = vector.shape_cast %33 : vector<2xf32> to vector<2x1xf32>
    %35 = vector.broadcast %34 : vector<2x1xf32> to vector<2x8xf32>
    %36 = arith.subf %30, %35 : vector<2x8xf32>
    %37 = math.exp %36 : vector<2x8xf32>
    %cst_16 = arith.constant dense<0.000000e+00> : vector<2xf32>
    %38 = vector.multi_reduction <add>, %37, %cst_16 [1] : vector<2x8xf32> to vector<2xf32>
    %39 = vector.shape_cast %38 : vector<2xf32> to vector<2x1xf32>
    %40 = vector.broadcast %34 : vector<2x1xf32> to vector<2x8xf32>
    %41 = arith.subf %30, %40 : vector<2x8xf32>
    %42 = math.log %39 : vector<2x1xf32>
    %43 = vector.broadcast %42 : vector<2x1xf32> to vector<2x8xf32>
    %44 = arith.subf %41, %43 : vector<2x8xf32>
    %45 = vector.broadcast %39 : vector<2x1xf32> to vector<2x8xf32>
    %46 = arith.divf %37, %45 : vector<2x8xf32>
    %47 = vector.broadcast %2 : vector<1x8xf32> to vector<2x8xf32>
    %48 = arith.mulf %32, %47 : vector<2x8xf32>
    %cst_17 = arith.constant dense<0.000000e+00> : vector<2xf32>
    %49 = vector.multi_reduction <add>, %48, %cst_17 [1] : vector<2x8xf32> to vector<2xf32>
    %50 = vector.shape_cast %49 : vector<2xf32> to vector<2x1xf32>
    %51 = arith.mulf %32, %44 : vector<2x8xf32>
    %cst_18 = arith.constant dense<0.000000e+00> : vector<2xf32>
    %52 = vector.multi_reduction <add>, %51, %cst_18 [1] : vector<2x8xf32> to vector<2xf32>
    %53 = vector.shape_cast %52 : vector<2xf32> to vector<2x1xf32>
    %cst_19 = arith.constant 0.000000e+00 : f32
    %54 = vector.broadcast %cst_19 : f32 to vector<2x1xf32>
    %55 = arith.subf %54, %53 : vector<2x1xf32>
    %56 = vector.extract_strided_slice %4 {offsets = [0, 0], sizes = [1, 8], strides = [1, 1]} : vector<3x8xf32> to vector<1x8xf32>
    %57 = vector.broadcast %56 : vector<1x8xf32> to vector<2x8xf32>
    %58 = arith.mulf %46, %57 : vector<2x8xf32>
    %cst_20 = arith.constant dense<0.000000e+00> : vector<2xf32>
    %59 = vector.multi_reduction <add>, %58, %cst_20 [1] : vector<2x8xf32> to vector<2xf32>
    %60 = vector.shape_cast %59 : vector<2xf32> to vector<2x1xf32>
    %61 = vector.broadcast %56 : vector<1x8xf32> to vector<2x8xf32>
    %62 = arith.mulf %32, %61 : vector<2x8xf32>
    %cst_21 = arith.constant dense<0.000000e+00> : vector<2xf32>
    %63 = vector.multi_reduction <add>, %62, %cst_21 [1] : vector<2x8xf32> to vector<2xf32>
    %64 = vector.shape_cast %63 : vector<2xf32> to vector<2x1xf32>
    %cst_22 = arith.constant 0.000000e+00 : f32
    %65 = vector.broadcast %cst_22 : f32 to vector<2x1xf32>
    %66 = arith.subf %65, %64 : vector<2x1xf32>
    %cst_23 = arith.constant 1.000000e-30 : f32
    %67 = vector.broadcast %cst_23 : f32 to vector<2x1xf32>
    %68 = arith.maximumf %60, %67 : vector<2x1xf32>
    %69 = math.log %68 : vector<2x1xf32>
    %70 = arith.mulf %66, %69 : vector<2x1xf32>
    %71 = vector.shape_cast %70 : vector<2x1xf32> to vector<1x2x1xf32>
    %cst_24 = arith.constant dense<0.000000e+00> : vector<1xf32>
    %72 = vector.multi_reduction <add>, %71, %cst_24 [1, 2] : vector<1x2x1xf32> to vector<1xf32>
    %73 = vector.shape_cast %72 : vector<1xf32> to vector<1x1x1xf32>
    %74 = vector.extract %73[0, 0, 0] : f32 from vector<1x1x1xf32>
    %cst_25 = arith.constant 0.000000e+00 : f32
    %75 = arith.addf %cst_25, %74 : f32
    %76 = vector.extract_strided_slice %4 {offsets = [1, 0], sizes = [1, 8], strides = [1, 1]} : vector<3x8xf32> to vector<1x8xf32>
    %77 = vector.broadcast %76 : vector<1x8xf32> to vector<2x8xf32>
    %78 = arith.mulf %46, %77 : vector<2x8xf32>
    %cst_26 = arith.constant dense<0.000000e+00> : vector<2xf32>
    %79 = vector.multi_reduction <add>, %78, %cst_26 [1] : vector<2x8xf32> to vector<2xf32>
    %80 = vector.shape_cast %79 : vector<2xf32> to vector<2x1xf32>
    %81 = vector.broadcast %76 : vector<1x8xf32> to vector<2x8xf32>
    %82 = arith.mulf %32, %81 : vector<2x8xf32>
    %cst_27 = arith.constant dense<0.000000e+00> : vector<2xf32>
    %83 = vector.multi_reduction <add>, %82, %cst_27 [1] : vector<2x8xf32> to vector<2xf32>
    %84 = vector.shape_cast %83 : vector<2xf32> to vector<2x1xf32>
    %cst_28 = arith.constant 0.000000e+00 : f32
    %85 = vector.broadcast %cst_28 : f32 to vector<2x1xf32>
    %86 = arith.subf %85, %84 : vector<2x1xf32>
    %cst_29 = arith.constant 1.000000e-30 : f32
    %87 = vector.broadcast %cst_29 : f32 to vector<2x1xf32>
    %88 = arith.maximumf %80, %87 : vector<2x1xf32>
    %89 = math.log %88 : vector<2x1xf32>
    %90 = arith.mulf %86, %89 : vector<2x1xf32>
    %91 = vector.shape_cast %90 : vector<2x1xf32> to vector<1x2x1xf32>
    %cst_30 = arith.constant dense<0.000000e+00> : vector<1xf32>
    %92 = vector.multi_reduction <add>, %91, %cst_30 [1, 2] : vector<1x2x1xf32> to vector<1xf32>
    %93 = vector.shape_cast %92 : vector<1xf32> to vector<1x1x1xf32>
    %94 = vector.extract %93[0, 0, 0] : f32 from vector<1x1x1xf32>
    %95 = arith.addf %75, %94 : f32
    %96 = vector.extract_strided_slice %4 {offsets = [2, 0], sizes = [1, 8], strides = [1, 1]} : vector<3x8xf32> to vector<1x8xf32>
    %97 = vector.broadcast %96 : vector<1x8xf32> to vector<2x8xf32>
    %98 = arith.mulf %46, %97 : vector<2x8xf32>
    %cst_31 = arith.constant dense<0.000000e+00> : vector<2xf32>
    %99 = vector.multi_reduction <add>, %98, %cst_31 [1] : vector<2x8xf32> to vector<2xf32>
    %100 = vector.shape_cast %99 : vector<2xf32> to vector<2x1xf32>
    %101 = vector.broadcast %96 : vector<1x8xf32> to vector<2x8xf32>
    %102 = arith.mulf %32, %101 : vector<2x8xf32>
    %cst_32 = arith.constant dense<0.000000e+00> : vector<2xf32>
    %103 = vector.multi_reduction <add>, %102, %cst_32 [1] : vector<2x8xf32> to vector<2xf32>
    %104 = vector.shape_cast %103 : vector<2xf32> to vector<2x1xf32>
    %cst_33 = arith.constant 0.000000e+00 : f32
    %105 = vector.broadcast %cst_33 : f32 to vector<2x1xf32>
    %106 = arith.subf %105, %104 : vector<2x1xf32>
    %cst_34 = arith.constant 1.000000e-30 : f32
    %107 = vector.broadcast %cst_34 : f32 to vector<2x1xf32>
    %108 = arith.maximumf %100, %107 : vector<2x1xf32>
    %109 = math.log %108 : vector<2x1xf32>
    %110 = arith.mulf %106, %109 : vector<2x1xf32>
    %111 = vector.shape_cast %110 : vector<2x1xf32> to vector<1x2x1xf32>
    %cst_35 = arith.constant dense<0.000000e+00> : vector<1xf32>
    %112 = vector.multi_reduction <add>, %111, %cst_35 [1, 2] : vector<1x2x1xf32> to vector<1xf32>
    %113 = vector.shape_cast %112 : vector<1xf32> to vector<1x1x1xf32>
    %114 = vector.extract %113[0, 0, 0] : f32 from vector<1x1x1xf32>
    %115 = arith.addf %95, %114 : f32
    %c0_36 = arith.constant 0 : index
    %116 = memref.load %arg5[%c0_36] : memref<4xf32, #tpu.memory_space<smem>>
    memref.store %24, %arg5[%c0_36] : memref<4xf32, #tpu.memory_space<smem>>
    %117 = arith.mulf %50, %55 : vector<2x1xf32>
    %118 = vector.shape_cast %117 : vector<2x1xf32> to vector<1x2x1xf32>
    %cst_37 = arith.constant dense<0.000000e+00> : vector<1xf32>
    %119 = vector.multi_reduction <add>, %118, %cst_37 [1, 2] : vector<1x2x1xf32> to vector<1xf32>
    %120 = vector.shape_cast %119 : vector<1xf32> to vector<1x1x1xf32>
    %121 = vector.extract %120[0, 0, 0] : f32 from vector<1x1x1xf32>
    %c1 = arith.constant 1 : index
    %122 = memref.load %arg5[%c1] : memref<4xf32, #tpu.memory_space<smem>>
    memref.store %121, %arg5[%c1] : memref<4xf32, #tpu.memory_space<smem>>
    %123 = vector.shape_cast %50 : vector<2x1xf32> to vector<1x2x1xf32>
    %cst_38 = arith.constant dense<0.000000e+00> : vector<1xf32>
    %124 = vector.multi_reduction <add>, %123, %cst_38 [1, 2] : vector<1x2x1xf32> to vector<1xf32>
    %125 = vector.shape_cast %124 : vector<1xf32> to vector<1x1x1xf32>
    %126 = vector.extract %125[0, 0, 0] : f32 from vector<1x1x1xf32>
    %c2 = arith.constant 2 : index
    %127 = memref.load %arg5[%c2] : memref<4xf32, #tpu.memory_space<smem>>
    memref.store %126, %arg5[%c2] : memref<4xf32, #tpu.memory_space<smem>>
    %c3 = arith.constant 3 : index
    %128 = memref.load %arg5[%c3] : memref<4xf32, #tpu.memory_space<smem>>
    memref.store %115, %arg5[%c3] : memref<4xf32, #tpu.memory_space<smem>>
    return
  }
}

</mosaic_0001>

<llo_original>
// kernel: loss_fn.2
$region0: #{loss_fn.2}
  #allocation0 [shape = 'u32[]', space=smem, size = 0x4, offset = 0x4, fixed_abs, tag = 'smem constant byte address 0x4 - core index']
  #allocation1 [shape = 'u32[144,128]{1,0:T(1,128)}', space=vmem, size = 0x12000, scoped, tag = 'internal scratch']
  %s0 = inlined_call_operand.vmem [shape: f32[16,128], index: 0, kind: input, shape index: {}]
  %s1 = inlined_call_operand.vmem [shape: f32[16,128], index: 1, kind: input, shape index: {}]
  %s2 = inlined_call_operand.vmem [shape: f32[1,4,128], index: 2, kind: output, shape index: {}]
  %s3 = sld [smem:[#allocation0]]
  $region22: #{loss_fn.2} parent=0
    _
  %s5 = ssub.s32 1, %s3
  %s6 = scalar_select 0, %s5, %s3
  // Predicated region
  $region2: #{loss_fn.2} parent=0 // pred_check
    _
  $region3: #{loss_fn.2} parent=0 // pred_check_branch
    %8 = sbr.rel (0) target = $region5
  $region4: #{loss_fn.2} parent=0 // pred_region
    %s9 = sadd.s32 0, 0
    %s10 = smul.u32 2, %s9
    %p11 = scmp.lt.s32.totalorder %s10, 1
    %s12 = scalar_select %p11, %s10, 1
    %s13 = smul.addr %s12, 8
    %s14 = scalar_lea.vmem %s0, %s13
    %s15 = sadd.s32 0, 0
    %s16 = smul.u32 2, %s15
  $region5: #{loss_fn.2} parent=0 // pred_fallthru
    _
  // Predicated region
  $region6: #{loss_fn.2} parent=0 // pred_check
    _
  $region7: #{loss_fn.2} parent=0 // pred_check_branch
    %18 = sbr.rel (0) target = $region9
  $region8: #{loss_fn.2} parent=0 // pred_region
    %s19 = sadd.s32 0, 0
    %s20 = smul.u32 2, %s19
    %p21 = scmp.lt.s32.totalorder %s20, 1
    %s22 = scalar_select %p21, %s20, 1
    %s23 = smul.addr %s22, 8
    %s24 = scalar_lea.vmem %s1, %s23
    %s25 = sadd.s32 0, 0
    %s26 = smul.u32 2, %s25
  $region9: #{loss_fn.2} parent=0 // pred_fallthru
    _
  %s27 = sadd.s32 0, 0
  %s28 = smul.u32 2, %s27
  %p29 = scmp.lt.s32.totalorder %s28, 1
  %s30 = scalar_select %p29, %s28, 1
  %s31 = smul.addr %s30, 8
  %s32 = scalar_lea.vmem %s0, %s31
  %s33 = sadd.s32 0, 0
  %s34 = smul.u32 2, %s33
  %p35 = scmp.lt.s32.totalorder %s34, 1
  %s36 = scalar_select %p35, %s34, 1
  %s37 = smul.addr %s36, 8
  %s38 = scalar_lea.vmem %s1, %s37
  %s39 = sadd.s32 0, 0
  %s40 = smul.u32 2, %s39
  %p41 = scmp.lt.s32.totalorder %s40, 1
  %s42 = scalar_select %p41, %s40, 1
  %s43 = smul.addr %s42, 8
  %s44 = scalar_lea.vmem %s0, %s43
  %s45 = sadd.s32 0, 0
  %s46 = smul.u32 2, %s45
  %s47 = sadd.s32 0, 0
  %s48 = smul.u32 2, %s47
  %p49 = scmp.lt.s32.totalorder %s48, 1
  %s50 = scalar_select %p49, %s48, 1
  %s51 = smul.addr %s50, 8
  %s52 = scalar_lea.vmem %s1, %s51
  %s53 = sadd.s32 0, 0
  %s54 = smul.u32 2, %s53
  %p55 = scmp.eq.s32.totalorder 0, 0
  // Predicated region
  $region10: #{loss_fn.2} parent=0 // pred_check
    %p56 = pneg %p55
  $region11: #{loss_fn.2} parent=0 // pred_check_branch
    %58 = sbr.rel (%p56) target = $region13
  $region12: #{loss_fn.2} parent=0 // pred_region
    %59 = vst [vmem:[%s2] sm:$0xf] 0.0
  $region13: #{loss_fn.2} parent=0 // pred_fallthru
    _
  %v60 = vld [vmem:[%s44] sm:$0xff]
  %v61 = vld [vmem:[%s44 + $0x8] sm:$0xff]
  %v62 = vld [vmem:[%s52] sm:$0xff]
  %v63 = vld [vmem:[%s52 + $0x8] sm:$0xff]
  %v64 = vlog2.pop %v60
  %v65 = vmul.f32 %v64, 0.6931472
  %v66 = vlog2.pop %v61
  %v67 = vmul.f32 %v66, 0.6931472
  %v68 = vmax.f32 %v65, -100.0
  %v69 = vmax.f32 %v67, -100.0
  %v70 = vsub.f32 1.0, %v60
  %v71 = vsub.f32 1.0, %v61
  %v72 = vlog2.pop %v70
  %v73 = vmul.f32 %v72, 0.6931472
  %v74 = vlog2.pop %v71
  %v75 = vmul.f32 %v74, 0.6931472
  %v76 = vmax.f32 %v73, -100.0
  %v77 = vmax.f32 %v75, -100.0
  %v78 = vmul.f32 %v62, %v68
  %v79 = vmul.f32 %v63, %v69
  %v80 = vsub.f32 1.0, %v62
  %v81 = vsub.f32 1.0, %v63
  %v82 = vmul.f32 %v80, %v76
  %v83 = vmul.f32 %v81, %v77
  %v84 = vadd.f32 %v78, %v82
  %v85 = vadd.f32 %v79, %v83
  %v86 = vsub.f32 0.0, %v84
  %v87 = vsub.f32 0.0, %v85
  %v88 = vld [vmem:[%s2] sm:$0x1]
  %v89 = vmul.f32 %v60, %v62
  %v90 = vmul.f32 %v61, %v63
  %v91 = vadd.f32 %v89, %v90
  %v92 = vrot.slane %v91, 4
  %v93 = vadd.f32 %v91, %v92
  %v94 = vrot.slane %v93, 2
  %v95 = vadd.f32 %v93, %v94
  %v96 = vrot.slane %v95, 1
  %v97 = vadd.f32 %v95, %v96
  %v98 = vadd.f32 %v88, %v97
  %99 = vst [vmem:[%s2] sm:$0x1] %v98
  %v100 = vld [vmem:[%s2 + $0x1] sm:$0x1]
  %v101 = vadd.f32 %v60, %v61
  %v102 = vrot.slane %v101, 4
  %v103 = vadd.f32 %v101, %v102
  %v104 = vrot.slane %v103, 2
  %v105 = vadd.f32 %v103, %v104
  %v106 = vrot.slane %v105, 1
  %v107 = vadd.f32 %v105, %v106
  %v108 = vadd.f32 %v100, %v107
  %109 = vst [vmem:[%s2 + $0x1] sm:$0x1] %v108
  %v110 = vld [vmem:[%s2 + $0x2] sm:$0x1]
  %v111 = vadd.f32 %v62, %v63
  %v112 = vrot.slane %v111, 4
  %v113 = vadd.f32 %v111, %v112
  %v114 = vrot.slane %v113, 2
  %v115 = vadd.f32 %v113, %v114
  %v116 = vrot.slane %v115, 1
  %v117 = vadd.f32 %v115, %v116
  %v118 = vadd.f32 %v110, %v117
  %119 = vst [vmem:[%s2 + $0x2] sm:$0x1] %v118
  %v120 = vld [vmem:[%s2 + $0x3] sm:$0x1]
  %v121 = vadd.f32 %v86, %v87
  %v122 = vrot.slane %v121, 4
  %v123 = vadd.f32 %v121, %v122
  %v124 = vrot.slane %v123, 2
  %v125 = vadd.f32 %v123, %v124
  %v126 = vrot.slane %v125, 1
  %v127 = vadd.f32 %v125, %v126
  %v128 = vadd.f32 %v120, %v127
  %129 = vst [vmem:[%s2 + $0x3] sm:$0x1] %v128
  // Predicated region
  $region14: #{loss_fn.2} parent=0 // pred_check
    _
  $region15: #{loss_fn.2} parent=0 // pred_check_branch
    %131 = sbr.rel (0) target = $region17
  $region16: #{loss_fn.2} parent=0 // pred_region
    _
  $region17: #{loss_fn.2} parent=0 // pred_fallthru
    _
  // Predicated region
  $region18: #{loss_fn.2} parent=0 // pred_check
    _
  $region19: #{loss_fn.2} parent=0 // pred_check_branch
    %133 = sbr.rel (0) target = $region21
  $region20: #{loss_fn.2} parent=0 // pred_region
    _
  $region21: #{loss_fn.2} parent=0 // pred_fallthru
    _

// kernel: loss_fn.3
$region0: #{loss_fn.3}
  #allocation0 [shape = 'u32[]', space=smem, size = 0x4, offset = 0x4, fixed_abs, tag = 'smem constant byte address 0x4 - core index']
  #allocation1 [shape = 'u32[144,128]{1,0:T(1,128)}', space=vmem, size = 0x12000, scoped, tag = 'internal scratch']
  %s0 = inlined_call_operand.vmem [shape: f32[2,8], index: 0, kind: input, shape index: {}]
  %s1 = inlined_call_operand.vmem [shape: f32[2,8], index: 1, kind: input, shape index: {}]
  %s2 = inlined_call_operand.vmem [shape: f32[1,8], index: 2, kind: input, shape index: {}]
  %s3 = inlined_call_operand.vmem [shape: f32[1,8], index: 3, kind: input, shape index: {}]
  %s4 = inlined_call_operand.vmem [shape: f32[3,8], index: 4, kind: input, shape index: {}]
  %s5 = inlined_call_operand.vmem [shape: f32[4], index: 5, kind: output, shape index: {}]
  %s6 = sld [smem:[#allocation0]]
  $region30: #{loss_fn.3} parent=0
    _
  %s8 = ssub.s32 1, %s6
  %s9 = scalar_select 0, %s8, %s6
  $region1: #{loss_fn.3} parent=0
    #allocation2 [shape = 'u8[512]{0}', space=smem, size = 0x200, scoped, tag = 'output window, operand 0, single buffered']
    #allocation3 [shape = 's32[1]{0}', space=sflag, size = 0x4, scoped, tag = 'scoped memory for loss_fn.3']
    %10 = vsyncpa [#allocation3], 0
    // Predicated region
    $region2: #{loss_fn.3} parent=1 // pred_check
      _
    $region3: #{loss_fn.3} parent=1 // pred_check_branch
      %12 = sbr.rel (0) target = $region5
    $region4: #{loss_fn.3} parent=1 // pred_region
      _
    $region5: #{loss_fn.3} parent=1 // pred_fallthru
      _
    // Predicated region
    $region6: #{loss_fn.3} parent=1 // pred_check
      _
    $region7: #{loss_fn.3} parent=1 // pred_check_branch
      %14 = sbr.rel (0) target = $region9
    $region8: #{loss_fn.3} parent=1 // pred_region
      _
    $region9: #{loss_fn.3} parent=1 // pred_fallthru
      _
    // Predicated region
    $region10: #{loss_fn.3} parent=1 // pred_check
      _
    $region11: #{loss_fn.3} parent=1 // pred_check_branch
      %16 = sbr.rel (0) target = $region13
    $region12: #{loss_fn.3} parent=1 // pred_region
      _
    $region13: #{loss_fn.3} parent=1 // pred_fallthru
      _
    // Predicated region
    $region14: #{loss_fn.3} parent=1 // pred_check
      _
    $region15: #{loss_fn.3} parent=1 // pred_check_branch
      %18 = sbr.rel (0) target = $region17
    $region16: #{loss_fn.3} parent=1 // pred_region
      _
    $region17: #{loss_fn.3} parent=1 // pred_fallthru
      _
    // Predicated region
    $region18: #{loss_fn.3} parent=1 // pred_check
      _
    $region19: #{loss_fn.3} parent=1 // pred_check_branch
      %20 = sbr.rel (0) target = $region21
    $region20: #{loss_fn.3} parent=1 // pred_region
      _
    $region21: #{loss_fn.3} parent=1 // pred_fallthru
      _
    %v21 = vld [vmem:[%s0] sm:$0x3]
    %v22 = vld [vmem:[%s1] sm:$0x3]
    %v23 = vld [vmem:[%s2] sm:$0x1]
    %v24 = vld [vmem:[%s3] sm:$0x1]
    %v25 = vld [vmem:[%s4] sm:$0x7]
    %v26 = vsub.f32 1.0, %v24
    %v27 = vmax.f32 %v21, 0.0
    %v28 = vmul.f32 %v21, %v22
    %v29 = vsub.f32 %v27, %v28
    %v30 = vand.u32 2147483647, %v21
    %v31 = vsub.f32 0.0, %v30
    %v32 = vmul.f32 %v31, 1.442695
    %v33 = vpow.pop %v32
    %v34 = vadd.f32 %v33, 1.0
    %v35 = vlog2.pop %v34
    %v36 = vmul.f32 %v35, 0.6931472
    %v37 = vadd.f32 %v29, %v36
    %v39 = vlaneseq
    %v40 = vshrl.u32 %v39, 7
    %v41 = vsub.s32 0, %v40
    %v42 = vrot.slane %v26, %v41
    %v44 = vmul.f32 %v37, %v42
    %vm45 = vcmask 58368
    %v46 = vsel %vm45, %v44, 0.0
    %47 = vadd.xlane.f32.xlu0 %v46
    %v48 = vpop.xlane.xlu0 %47
    %v49 = vrot.slane %v48, 4
    %v50 = vadd.f32 %v48, %v49
    %v51 = vrot.slane %v50, 2
    %v52 = vadd.f32 %v50, %v51
    %v53 = vrot.slane %v52, 1
    %v54 = vadd.f32 %v52, %v53
    %s55 = vtos %v54
    %vm56 = vcmp.gt.f32.partialorder %v24, 0.5
    %v57 = vsel %vm56, 1, 0
    %v58 = vlaneseq
    %v59 = vshrl.u32 %v58, 7
    %v60 = vsub.s32 0, %v59
    %v61 = vrot.slane %v57, %v60
    %vm62 = vcmp.eq.s32.totalorder %v61, 1
    %v63 = vsel %vm62, %v21, -1e+30
    %v65 = vlaneseq
    %v66 = vshrl.u32 %v65, 7
    %v67 = vsub.s32 0, %v66
    %v68 = vrot.slane %v24, %v67
    %v70 = vmul.f32 %v22, %v68
    %v71 = vsel %vm45, %v63, -inf
    %72 = vmax.xlane.f32.xlu0 %v71
    %v73 = vpop.xlane.xlu0 %72
    %v74 = vsub.f32 %v63, %v73
    %v75 = vmul.f32 %v74, 1.442695
    %v76 = vpow.pop %v75
    %v77 = vsel %vm45, %v76, 0.0
    %78 = vadd.xlane.f32.xlu0 %v77
    %v79 = vpop.xlane.xlu0 %78
    %v80 = vlog2.pop %v79
    %v81 = vmul.f32 %v80, 0.6931472
    %v82 = vsub.f32 %v74, %v81
    %v83 = vrcp.pop %v79
    %v84 = vmul.f32 %v76, %v83
    %v86 = vlaneseq
    %v87 = vshrl.u32 %v86, 7
    %v88 = vsub.s32 0, %v87
    %v89 = vrot.slane %v23, %v88
    %v91 = vmul.f32 %v70, %v89
    %v92 = vsel %vm45, %v91, 0.0
    %93 = vadd.xlane.f32.xlu0 %v92
    %v94 = vpop.xlane.xlu0 %93
    %v95 = vmul.f32 %v70, %v82
    %v96 = vsel %vm45, %v95, 0.0
    %97 = vadd.xlane.f32.xlu0 %v96
    %v98 = vpop.xlane.xlu0 %97
    %v99 = vsub.f32 0.0, %v98
    %v100 = vlaneseq
    %v101 = vshrl.u32 %v100, 7
    %v102 = vsub.s32 0, %v101
    %v103 = vrot.slane %v25, %v102
    %v104 = vmul.f32 %v84, %v103
    %v105 = vsel %vm45, %v104, 0.0
    %106 = vadd.xlane.f32.xlu0 %v105
    %v107 = vpop.xlane.xlu0 %106
    %v108 = vmul.f32 %v70, %v103
    %v109 = vsel %vm45, %v108, 0.0
    %110 = vadd.xlane.f32.xlu0 %v109
    %v111 = vpop.xlane.xlu0 %110
    %v112 = vsub.f32 0.0, %v111
    %v113 = vmax.f32 %v107, 1e-30
    %v114 = vlog2.pop %v113
    %v115 = vmul.f32 %v114, 0.6931472
    %v116 = vmul.f32 %v112, %v115
    %vm117 = vcmask 1024
    %v118 = vsel %vm117, %v116, 0.0
    %119 = vadd.xlane.f32.xlu0 %v118
    %v120 = vpop.xlane.xlu0 %119
    %v121 = vrot.slane %v120, 4
    %v122 = vadd.f32 %v120, %v121
    %v123 = vrot.slane %v122, 2
    %v124 = vadd.f32 %v122, %v123
    %v125 = vrot.slane %v124, 1
    %v126 = vadd.f32 %v124, %v125
    %s127 = vtos %v126
    %s128 = sadd.f32 %s127, 0.0
    %v129 = vlaneseq
    %v130 = vshrl.u32 %v129, 7
    %v131 = vsub.s32 1, %v130
    %v132 = vrot.slane %v25, %v131
    %v133 = vmul.f32 %v84, %v132
    %v134 = vsel %vm45, %v133, 0.0
    %135 = vadd.xlane.f32.xlu0 %v134
    %v136 = vpop.xlane.xlu0 %135
    %v137 = vmul.f32 %v70, %v132
    %v138 = vsel %vm45, %v137, 0.0
    %139 = vadd.xlane.f32.xlu0 %v138
    %v140 = vpop.xlane.xlu0 %139
    %v141 = vsub.f32 0.0, %v140
    %v142 = vmax.f32 %v136, 1e-30
    %v143 = vlog2.pop %v142
    %v144 = vmul.f32 %v143, 0.6931472
    %v145 = vmul.f32 %v141, %v144
    %v146 = vsel %vm117, %v145, 0.0
    %147 = vadd.xlane.f32.xlu0 %v146
    %v148 = vpop.xlane.xlu0 %147
    %v149 = vrot.slane %v148, 4
    %v150 = vadd.f32 %v148, %v149
    %v151 = vrot.slane %v150, 2
    %v152 = vadd.f32 %v150, %v151
    %v153 = vrot.slane %v152, 1
    %v154 = vadd.f32 %v152, %v153
    %s155 = vtos %v154
    %s156 = sadd.f32 %s128, %s155
    %v157 = vlaneseq
    %v158 = vshrl.u32 %v157, 7
    %v159 = vsub.s32 2, %v158
    %v160 = vrot.slane %v25, %v159
    %v161 = vmul.f32 %v84, %v160
    %v162 = vsel %vm45, %v161, 0.0
    %163 = vadd.xlane.f32.xlu0 %v162
    %v164 = vpop.xlane.xlu0 %163
    %v165 = vmul.f32 %v70, %v160
    %v166 = vsel %vm45, %v165, 0.0
    %167 = vadd.xlane.f32.xlu0 %v166
    %v168 = vpop.xlane.xlu0 %167
    %v169 = vsub.f32 0.0, %v168
    %v170 = vmax.f32 %v164, 1e-30
    %v171 = vlog2.pop %v170
    %v172 = vmul.f32 %v171, 0.6931472
    %v173 = vmul.f32 %v169, %v172
    %v174 = vsel %vm117, %v173, 0.0
    %175 = vadd.xlane.f32.xlu0 %v174
    %v176 = vpop.xlane.xlu0 %175
    %v177 = vrot.slane %v176, 4
    %v178 = vadd.f32 %v176, %v177
    %v179 = vrot.slane %v178, 2
    %v180 = vadd.f32 %v178, %v179
    %v181 = vrot.slane %v180, 1
    %v182 = vadd.f32 %v180, %v181
    %s183 = vtos %v182
    %s184 = sadd.f32 %s156, %s183
    %s185 = scalar_lea.smem [#allocation2], 0
    %186 = sst [smem:[%s185]] %s55
    %v187 = vmul.f32 %v94, %v99
    %v188 = vsel %vm117, %v187, 0.0
    %189 = vadd.xlane.f32.xlu0 %v188
    %v190 = vpop.xlane.xlu0 %189
    %v191 = vrot.slane %v190, 4
    %v192 = vadd.f32 %v190, %v191
    %v193 = vrot.slane %v192, 2
    %v194 = vadd.f32 %v192, %v193
    %v195 = vrot.slane %v194, 1
    %v196 = vadd.f32 %v194, %v195
    %s197 = vtos %v196
    %s198 = scalar_lea.smem [#allocation2], 1
    %199 = sst [smem:[%s198]] %s197
    %v200 = vsel %vm117, %v94, 0.0
    %201 = vadd.xlane.f32.xlu0 %v200
    %v202 = vpop.xlane.xlu0 %201
    %v203 = vrot.slane %v202, 4
    %v204 = vadd.f32 %v202, %v203
    %v205 = vrot.slane %v204, 2
    %v206 = vadd.f32 %v204, %v205
    %v207 = vrot.slane %v206, 1
    %v208 = vadd.f32 %v206, %v207
    %s209 = vtos %v208
    %s210 = scalar_lea.smem [#allocation2], 2
    %211 = sst [smem:[%s210]] %s209
    %s212 = scalar_lea.smem [#allocation2], 3
    %213 = sst [smem:[%s212]] %s184
    // Predicated region
    $region22: #{loss_fn.3} parent=1 // pred_check
      _
    $region23: #{loss_fn.3} parent=1 // pred_check_branch
      %215 = sbr.rel (0) target = $region25
    $region24: #{loss_fn.3} parent=1 // pred_region
      %s217 = ssub.s32 16, 16
      %218 = vsyncadd [#allocation3], %s217
      %s220 = sshll.u32 %s5, 4
      %s221 = int_to_ptr.vmem [resolvable:$true] %s220
      %223 = dma.smem_to_vmem [#allocation2], 16, %s221, [#allocation3]
    $region25: #{loss_fn.3} parent=1 // pred_fallthru
      _
    // Predicated region
    $region26: #{loss_fn.3} parent=1 // pred_check
      _
    $region27: #{loss_fn.3} parent=1 // pred_check_branch
      %225 = sbr.rel (0) target = $region29
    $region28: #{loss_fn.3} parent=1 // pred_region
      %226 = dma.done [#allocation3], 16
    $region29: #{loss_fn.3} parent=1 // pred_fallthru
      _
    %227 = sfence
    %228 = vsyncpa [#allocation3], 1

</llo_original>
